<compile_context>
chip_gen: v7x
topology: tpu7x:2x2x1
jax: 0.10.0
libtpu: 0.0.40
codegen_flags: <defaults>
</compile_context>

<pallas_src>
import jax
import jax.numpy as jnp
from jax.experimental import pallas as pl
from jax.experimental.pallas import tpu as pltpu

# ---------------- shapes (small, deterministic, synthetic) ----------------
B = 8          # batch
F = 16         # number of numerical features
D = 32         # base_output_dim
H = 64         # llama hidden_size (zero-padded to 128 lanes in all slabs)
H_PAD = 128    # lane-padded hidden width
I = 128        # llama intermediate (MLP) size
D_OUT = 4      # number of classes
OUT_PAD = 128  # lane-dense padded output width
EPS = 1e-6     # LLaMA rms_norm_eps

# packed-slab layout (all column offsets 128-lane aligned, all pads exact zeros)
#   wb [128, 384] bf16 : base_w rows 0:F cols 0:D           (block 0:128)
#                        cls_w + 1e-4*m1_w@m2_w@cls_w       (block 128:256, cols < D_OUT)
#                        m1_w                                (block 256:384, cols < H)
#   wa [128, 512] bf16 : ln2-folded wg | wu                  (block 0:256)
#                        ln1-folded Wv@Wo                    (block 256:384, cols < H)
#                        norm-folded m2_w@cls_w              (block 384:512, cols < D_OUT)
#   wd [128, 128] bf16 : down-proj, output cols >= H zero
#   vecs [8, 128] f32  : row0 base_b | row1 m1_b | row2 folded out-bias


def _rmsnorm(x):
    # RMSNorm with the weight folded into the next matmul.  Lanes >= H are exactly
    # zero everywhere on the chain, so sum/H == mean over the real H lanes.
    var = jnp.sum(x * x, axis=-1, keepdims=True) / H
    return x * jax.lax.rsqrt(var + EPS)


def tabular_llama_kernel(x_ref, vec_ref, wb_ref, wa_ref, wd_ref, out_ref):
    f32, bf16 = jnp.float32, jnp.bfloat16

    vecs = vec_ref[...]                    # [8, 128] f32
    base_b = vecs[0:1, :]                  # zeros beyond D
    m1_b = vecs[1:2, :]                    # zeros beyond H
    out_b = vecs[2:3, :]                   # folded m2_b@cls_w + cls_b + 1e-4*m1_b@m2_w@cls_w

    x = x_ref[...].astype(bf16)            # [B, F]

    # --- synthetic base_model(x_num, x_cat=None): Linear(F->D) + ReLU, 128-lane padded ---
    base_out = jnp.dot(x, wb_ref[0:F, 0:128], preferred_element_type=f32)
    base_out = jnp.maximum(base_out + base_b, 0.0)          # [B, 128] f32, zeros beyond D
    base_bf = base_out.astype(bf16)

    # --- fused dot: [folded classifier term | mapper1] ---
    # cls block already contains cls_w + 1e-4*(m1_w@m2_w@cls_w); the 1e-4 bias part
    # is folded into out_b, so the whole 1e-4 residual path is free here.
    r = jnp.dot(base_bf, wb_ref[:, 128:384], preferred_element_type=f32)   # [B, 256]
    cls_term = r[:, 0:128]
    llama_in = r[:, 128:256] + m1_b                         # [B, 128] f32, zeros beyond H

    # --- torch .half() emulated as a single bf16 round trip ---
    h = llama_in.astype(bf16).astype(f32)

    # --- one LLaMA decoder layer, seq_len == 1 ---
    # softmax over the length-1 key axis == 1 and RoPE at position 0 is identity,
    # so attention == RMSNorm(h) @ (diag(ln1_w) @ Wv @ Wo), folded offline.
    hn = _rmsnorm(h)
    h = h + jnp.dot(hn.astype(bf16), wa_ref[:, 256:384], preferred_element_type=f32)

    # post-attention RMSNorm + SwiGLU MLP (gate|up fused into one 256-wide dot)
    hn2 = _rmsnorm(h)
    gu = jnp.dot(hn2.astype(bf16), wa_ref[:, 0:256], preferred_element_type=f32)  # [B, 256]
    g = gu[:, :I]
    u = gu[:, I:]
    silu = g * pl.reciprocal(1.0 + jnp.exp(-g), approx=True)   # EUP exp + approx recip
    mlp_in = silu * u                                          # f32
    h = h + jnp.dot(mlp_in.astype(bf16), wd_ref[...], preferred_element_type=f32)

    # final model.norm (weight folded into m2cls) + folded mapper2->classifier tail
    llama_out = _rmsnorm(h)
    llama_term = jnp.dot(llama_out.astype(bf16), wa_ref[:, 384:512],
                         preferred_element_type=f32)
    out_ref[...] = cls_term + llama_term + out_b               # lanes >= D_OUT exactly 0


@jax.jit
def tabular_llama_forward(x_num, packed):
    vecs, wb, wa, wd = packed
    vmem = pl.BlockSpec(memory_space=pltpu.MemorySpace.VMEM)
    out = pl.pallas_call(
        tabular_llama_kernel,
        out_shape=jax.ShapeDtypeStruct((B, OUT_PAD), jnp.float32),
        in_specs=[vmem] * 5,
        out_specs=vmem,
        # tiny latency-bound kernel, ~265 KB moved: keep XLA from serializing around it
        cost_estimate=pl.CostEstimate(
            flops=1_900_000, transcendentals=1_100, bytes_accessed=266_000),
    )(x_num, vecs, wb, wa, wd)
    return out[:, :D_OUT]


def _linear_init(key, fan_in, fan_out):
    # deterministic nn.Linear-style init: U(-1/sqrt(fan_in), 1/sqrt(fan_in))
    kw, kb = jax.random.split(key)
    bound = 1.0 / (fan_in ** 0.5)
    w = jax.random.uniform(kw, (fan_in, fan_out), jnp.float32, -bound, bound)
    b = jax.random.uniform(kb, (1, fan_out), jnp.float32, -bound, bound)
    return w, b


def make_params(key):
    keys = jax.random.split(key, 9)
    base_w, base_b = _linear_init(keys[0], F, D)
    m1_w, m1_b = _linear_init(keys[1], D, H)
    ln1_w = jnp.ones((H,), jnp.float32)
    wv = _linear_init(keys[2], H, H)[0]       # LLaMA projections have no bias
    wo = _linear_init(keys[3], H, H)[0]
    ln2_w = jnp.ones((H,), jnp.float32)
    wg = _linear_init(keys[4], H, I)[0]
    wu = _linear_init(keys[5], H, I)[0]
    wd = _linear_init(keys[6], I, H)[0]
    normw = jnp.ones((H,), jnp.float32)
    m2_w, m2_b = _linear_init(keys[7], H, D)
    cls_w, cls_b = _linear_init(keys[8], D, D_OUT)
    return dict(base_w=base_w, base_b=base_b, m1_w=m1_w, m1_b=m1_b,
                ln1_w=ln1_w, wv=wv, wo=wo, ln2_w=ln2_w, wg=wg, wu=wu, wd=wd,
                normw=normw, m2_w=m2_w, m2_b=m2_b, cls_w=cls_w, cls_b=cls_b)


def pack_params(p):
    """Host-side (one-time) weight folding + packing into few lane-dense slabs."""
    # offline algebraic folds (full f32 precision, then cast to bf16 once)
    w_attn = p["ln1_w"][:, None] * (p["wv"] @ p["wo"])          # ln1 fold, [H, H]
    wgu = p["ln2_w"][:, None] * jnp.concatenate([p["wg"], p["wu"]], axis=1)  # [H, 2I]
    m2cls_raw = p["m2_w"] @ p["cls_w"]                          # [H, D_OUT]
    m2cls = p["normw"][:, None] * m2cls_raw                     # final-norm fold
    cls_fold = p["cls_w"] + 1e-4 * (p["m1_w"] @ m2cls_raw)      # 1e-4 residual (weight part)
    out_b = (p["m2_b"] @ p["cls_w"] + p["cls_b"]
             + 1e-4 * (p["m1_b"] @ m2cls_raw))                  # 1e-4 residual (bias part)

    # row-vector pack: one [8, 128] f32 tile
    vecs = jnp.zeros((8, OUT_PAD), jnp.float32)
    vecs = vecs.at[0, :D].set(p["base_b"][0])
    vecs = vecs.at[1, :H].set(p["m1_b"][0])
    vecs = vecs.at[2, :D_OUT].set(out_b[0])

    # slab B: contraction over base_out (lanes >= D are zero on the activation)
    wb = jnp.zeros((H_PAD, 384), jnp.float32)
    wb = wb.at[:F, :D].set(p["base_w"])
    wb = wb.at[:D, 128:128 + D_OUT].set(cls_fold)
    wb = wb.at[:D, 256:256 + H].set(p["m1_w"])
    wb = wb.astype(jnp.bfloat16)

    # slab A: contraction over the (128-lane-padded) llama hidden dim
    wa = jnp.zeros((H_PAD, 512), jnp.float32)
    wa = wa.at[:H, 0:2 * I].set(wgu)
    wa = wa.at[:H, 256:256 + H].set(w_attn)
    wa = wa.at[:H, 384:384 + D_OUT].set(m2cls)
    wa = wa.astype(jnp.bfloat16)

    # down projection, output lanes >= H zero so the residual padding stays exact
    wd = jnp.zeros((I, H_PAD), jnp.float32)
    wd = wd.at[:, :H].set(p["wd"])
    wd = wd.astype(jnp.bfloat16)
    return vecs, wb, wa, wd


if __name__ == "__main__":
    key = jax.random.PRNGKey(0)
    k_x, k_p = jax.random.split(key)
    x_num = jax.random.normal(k_x, (B, F), jnp.float32)
    x_cat = None  # categorical input unused by the synthetic base model
    params = make_params(k_p)
    packed = pack_params(params)

    out = tabular_llama_forward(x_num, packed)
    jax.block_until_ready(out)
    assert out.shape == (B, D_OUT) and out.dtype == jnp.float32
    print("KERNEL_OK")
</pallas_src>

<mosaic_0001>
module attributes {stable_mosaic.version = 11 : i64} {
  func.func @tabular_llama_kernel(%arg0: memref<8x16xf32, #tpu.memory_space<vmem>>, %arg1: memref<8x128xf32, #tpu.memory_space<vmem>>, %arg2: memref<128x384xbf16, #tpu.memory_space<vmem>>, %arg3: memref<128x512xbf16, #tpu.memory_space<vmem>>, %arg4: memref<128x128xbf16, #tpu.memory_space<vmem>>, %arg5: memref<8x128xf32, #tpu.memory_space<vmem>>) attributes {dimension_semantics = [], scalar_prefetch = 0 : i64, scratch_operands = 0 : i64, tpu.core_type = #tpu.core_type<tc>} {
    %c0 = arith.constant 0 : index
    %c0_0 = arith.constant 0 : index
    %0 = vector.load %arg1[%c0, %c0_0] : memref<8x128xf32, #tpu.memory_space<vmem>>, vector<8x128xf32>
    %1 = vector.extract_strided_slice %0 {offsets = [0, 0], sizes = [1, 128], strides = [1, 1]} : vector<8x128xf32> to vector<1x128xf32>
    %2 = vector.extract_strided_slice %0 {offsets = [1, 0], sizes = [1, 128], strides = [1, 1]} : vector<8x128xf32> to vector<1x128xf32>
    %3 = vector.extract_strided_slice %0 {offsets = [2, 0], sizes = [1, 128], strides = [1, 1]} : vector<8x128xf32> to vector<1x128xf32>
    %c0_1 = arith.constant 0 : index
    %c0_2 = arith.constant 0 : index
    %4 = vector.load %arg0[%c0_1, %c0_2] : memref<8x16xf32, #tpu.memory_space<vmem>>, vector<8x16xf32>
    %5 = arith.truncf %4 : vector<8x16xf32> to vector<8x16xbf16>
    %c0_3 = arith.constant 0 : index
    %c0_4 = arith.constant 0 : index
    %6 = vector.load %arg2[%c0_3, %c0_4] : memref<128x384xbf16, #tpu.memory_space<vmem>>, vector<16x128xbf16>
    %cst = arith.constant dense<0.000000e+00> : vector<8x128xf32>
    %7 = tpu.matmul %5, %6, %cst {dimension_numbers = #tpu.dot_dimension_numbers<[1], [0], [0], [1], [0, 0, 1, 1], [], []>} : vector<8x16xbf16>, vector<16x128xbf16>, vector<8x128xf32> -> vector<8x128xf32>
    %8 = vector.broadcast %1 : vector<1x128xf32> to vector<8x128xf32>
    %9 = arith.addf %7, %8 : vector<8x128xf32>
    %cst_5 = arith.constant 0.000000e+00 : f32
    %10 = vector.broadcast %cst_5 : f32 to vector<8x128xf32>
    %11 = arith.maximumf %9, %10 : vector<8x128xf32>
    %12 = arith.truncf %11 : vector<8x128xf32> to vector<8x128xbf16>
    %c0_6 = arith.constant 0 : index
    %c128 = arith.constant 128 : index
    %13 = vector.load %arg2[%c0_6, %c128] : memref<128x384xbf16, #tpu.memory_space<vmem>>, vector<128x256xbf16>
    %cst_7 = arith.constant dense<0.000000e+00> : vector<8x256xf32>
    %14 = tpu.matmul %12, %13, %cst_7 {dimension_numbers = #tpu.dot_dimension_numbers<[1], [0], [0], [1], [0, 0, 1, 1], [], []>} : vector<8x128xbf16>, vector<128x256xbf16>, vector<8x256xf32> -> vector<8x256xf32>
    %15 = vector.extract_strided_slice %14 {offsets = [0, 0], sizes = [8, 128], strides = [1, 1]} : vector<8x256xf32> to vector<8x128xf32>
    %16 = vector.extract_strided_slice %14 {offsets = [0, 128], sizes = [8, 128], strides = [1, 1]} : vector<8x256xf32> to vector<8x128xf32>
    %17 = vector.broadcast %2 : vector<1x128xf32> to vector<8x128xf32>
    %18 = arith.addf %16, %17 : vector<8x128xf32>
    %19 = arith.truncf %18 : vector<8x128xf32> to vector<8x128xbf16>
    %20 = arith.extf %19 : vector<8x128xbf16> to vector<8x128xf32>
    %21 = arith.mulf %20, %20 : vector<8x128xf32>
    %cst_8 = arith.constant dense<0.000000e+00> : vector<8xf32>
    %22 = vector.multi_reduction <add>, %21, %cst_8 [1] : vector<8x128xf32> to vector<8xf32>
    %23 = vector.shape_cast %22 : vector<8xf32> to vector<8x1xf32>
    %cst_9 = arith.constant 6.400000e+01 : f32
    %24 = vector.broadcast %cst_9 : f32 to vector<8x1xf32>
    %25 = arith.divf %23, %24 : vector<8x1xf32>
    %cst_10 = arith.constant 9.99999997E-7 : f32
    %26 = vector.broadcast %cst_10 : f32 to vector<8x1xf32>
    %27 = arith.addf %25, %26 : vector<8x1xf32>
    %28 = math.rsqrt %27 : vector<8x1xf32>
    %29 = vector.broadcast %28 : vector<8x1xf32> to vector<8x128xf32>
    %30 = arith.mulf %20, %29 : vector<8x128xf32>
    %31 = arith.truncf %30 : vector<8x128xf32> to vector<8x128xbf16>
    %c0_11 = arith.constant 0 : index
    %c256 = arith.constant 256 : index
    %32 = vector.load %arg3[%c0_11, %c256] : memref<128x512xbf16, #tpu.memory_space<vmem>>, vector<128x128xbf16>
    %cst_12 = arith.constant dense<0.000000e+00> : vector<8x128xf32>
    %33 = tpu.matmul %31, %32, %cst_12 {dimension_numbers = #tpu.dot_dimension_numbers<[1], [0], [0], [1], [0, 0, 1, 1], [], []>} : vector<8x128xbf16>, vector<128x128xbf16>, vector<8x128xf32> -> vector<8x128xf32>
    %34 = arith.addf %20, %33 : vector<8x128xf32>
    %35 = arith.mulf %34, %34 : vector<8x128xf32>
    %cst_13 = arith.constant dense<0.000000e+00> : vector<8xf32>
    %36 = vector.multi_reduction <add>, %35, %cst_13 [1] : vector<8x128xf32> to vector<8xf32>
    %37 = vector.shape_cast %36 : vector<8xf32> to vector<8x1xf32>
    %cst_14 = arith.constant 6.400000e+01 : f32
    %38 = vector.broadcast %cst_14 : f32 to vector<8x1xf32>
    %39 = arith.divf %37, %38 : vector<8x1xf32>
    %cst_15 = arith.constant 9.99999997E-7 : f32
    %40 = vector.broadcast %cst_15 : f32 to vector<8x1xf32>
    %41 = arith.addf %39, %40 : vector<8x1xf32>
    %42 = math.rsqrt %41 : vector<8x1xf32>
    %43 = vector.broadcast %42 : vector<8x1xf32> to vector<8x128xf32>
    %44 = arith.mulf %34, %43 : vector<8x128xf32>
    %45 = arith.truncf %44 : vector<8x128xf32> to vector<8x128xbf16>
    %c0_16 = arith.constant 0 : index
    %c0_17 = arith.constant 0 : index
    %46 = vector.load %arg3[%c0_16, %c0_17] : memref<128x512xbf16, #tpu.memory_space<vmem>>, vector<128x256xbf16>
    %cst_18 = arith.constant dense<0.000000e+00> : vector<8x256xf32>
    %47 = tpu.matmul %45, %46, %cst_18 {dimension_numbers = #tpu.dot_dimension_numbers<[1], [0], [0], [1], [0, 0, 1, 1], [], []>} : vector<8x128xbf16>, vector<128x256xbf16>, vector<8x256xf32> -> vector<8x256xf32>
    %48 = vector.extract_strided_slice %47 {offsets = [0, 0], sizes = [8, 128], strides = [1, 1]} : vector<8x256xf32> to vector<8x128xf32>
    %49 = vector.extract_strided_slice %47 {offsets = [0, 128], sizes = [8, 128], strides = [1, 1]} : vector<8x256xf32> to vector<8x128xf32>
    %cst_19 = arith.constant 0.000000e+00 : f32
    %50 = vector.broadcast %cst_19 : f32 to vector<8x128xf32>
    %51 = arith.subf %50, %48 : vector<8x128xf32>
    %52 = math.exp %51 : vector<8x128xf32>
    %cst_20 = arith.constant 1.000000e+00 : f32
    %53 = vector.broadcast %cst_20 : f32 to vector<8x128xf32>
    %54 = arith.addf %53, %52 : vector<8x128xf32>
    %55 = tpu.reciprocal %54 {approx = true} : vector<8x128xf32> -> vector<8x128xf32>
    %56 = arith.mulf %48, %55 : vector<8x128xf32>
    %57 = arith.mulf %56, %49 : vector<8x128xf32>
    %58 = arith.truncf %57 : vector<8x128xf32> to vector<8x128xbf16>
    %c0_21 = arith.constant 0 : index
    %c0_22 = arith.constant 0 : index
    %59 = vector.load %arg4[%c0_21, %c0_22] : memref<128x128xbf16, #tpu.memory_space<vmem>>, vector<128x128xbf16>
    %cst_23 = arith.constant dense<0.000000e+00> : vector<8x128xf32>
    %60 = tpu.matmul %58, %59, %cst_23 {dimension_numbers = #tpu.dot_dimension_numbers<[1], [0], [0], [1], [0, 0, 1, 1], [], []>} : vector<8x128xbf16>, vector<128x128xbf16>, vector<8x128xf32> -> vector<8x128xf32>
    %61 = arith.addf %34, %60 : vector<8x128xf32>
    %62 = arith.mulf %61, %61 : vector<8x128xf32>
    %cst_24 = arith.constant dense<0.000000e+00> : vector<8xf32>
    %63 = vector.multi_reduction <add>, %62, %cst_24 [1] : vector<8x128xf32> to vector<8xf32>
    %64 = vector.shape_cast %63 : vector<8xf32> to vector<8x1xf32>
    %cst_25 = arith.constant 6.400000e+01 : f32
    %65 = vector.broadcast %cst_25 : f32 to vector<8x1xf32>
    %66 = arith.divf %64, %65 : vector<8x1xf32>
    %cst_26 = arith.constant 9.99999997E-7 : f32
    %67 = vector.broadcast %cst_26 : f32 to vector<8x1xf32>
    %68 = arith.addf %66, %67 : vector<8x1xf32>
    %69 = math.rsqrt %68 : vector<8x1xf32>
    %70 = vector.broadcast %69 : vector<8x1xf32> to vector<8x128xf32>
    %71 = arith.mulf %61, %70 : vector<8x128xf32>
    %72 = arith.truncf %71 : vector<8x128xf32> to vector<8x128xbf16>
    %c0_27 = arith.constant 0 : index
    %c384 = arith.constant 384 : index
    %73 = vector.load %arg3[%c0_27, %c384] : memref<128x512xbf16, #tpu.memory_space<vmem>>, vector<128x128xbf16>
    %cst_28 = arith.constant dense<0.000000e+00> : vector<8x128xf32>
    %74 = tpu.matmul %72, %73, %cst_28 {dimension_numbers = #tpu.dot_dimension_numbers<[1], [0], [0], [1], [0, 0, 1, 1], [], []>} : vector<8x128xbf16>, vector<128x128xbf16>, vector<8x128xf32> -> vector<8x128xf32>
    %75 = arith.addf %15, %74 : vector<8x128xf32>
    %76 = vector.broadcast %3 : vector<1x128xf32> to vector<8x128xf32>
    %77 = arith.addf %75, %76 : vector<8x128xf32>
    %c0_29 = arith.constant 0 : index
    %c0_30 = arith.constant 0 : index
    %78 = vector.load %arg5[%c0_29, %c0_30] : memref<8x128xf32, #tpu.memory_space<vmem>>, vector<8x128xf32>
    tpu.vector_store %arg5[%c0_29, %c0_30], %77 {strides = array<i32>} : memref<8x128xf32, #tpu.memory_space<vmem>>, vector<8x128xf32>,
    return
  }
}

</mosaic_0001>

<llo_original>
// kernel: tabular_llama_forward.1
$region0: #{tabular_llama_forward.1}
  #allocation0 [shape = 'u32[]', space=smem, size = 0x4, offset = 0x4, fixed_abs, tag = 'smem constant byte address 0x4 - core index']
  #allocation1 [shape = 'u32[144,128]{1,0:T(1,128)}', space=vmem, size = 0x12000, scoped, tag = 'internal scratch']
  %s0 = inlined_call_operand.hbm [shape: f32[8,16], index: 0, kind: input, shape index: {}]
  %s1 = inlined_call_operand.hbm [shape: f32[8,128], index: 1, kind: input, shape index: {}]
  %s2 = inlined_call_operand.hbm [shape: bf16[128,384], index: 2, kind: input, shape index: {}]
  %s3 = inlined_call_operand.hbm [shape: bf16[128,512], index: 3, kind: input, shape index: {}]
  %s4 = inlined_call_operand.hbm [shape: bf16[128,128], index: 4, kind: input, shape index: {}]
  %s5 = inlined_call_operand.vmem [shape: f32[8,128], index: 5, kind: output, shape index: {}]
  %s6 = sld [smem:[#allocation0]]
  $region50: #{tabular_llama_forward.1} parent=0
    _
  %s8 = ssub.s32 1, %s6
  %s9 = scalar_select 0, %s8, %s6
  $region1: #{tabular_llama_forward.1} parent=0
    #allocation2 [shape = 'u8[4096]{0}', space=vmem, size = 0x1000, scoped, tag = 'input window, operand 0, single buffered']
    #allocation3 [shape = 's32[1]{0}', space=sflag, size = 0x4, scoped, tag = 'scoped memory for tabular_llama_forward.1']
    #allocation4 [shape = 'u8[4096]{0}', space=vmem, size = 0x1000, scoped, tag = 'input window, operand 1, single buffered']
    #allocation5 [shape = 's32[1]{0}', space=sflag, size = 0x4, scoped, tag = 'scoped memory for tabular_llama_forward.1']
    #allocation6 [shape = 'u8[98304]{0}', space=vmem, size = 0x18000, scoped, tag = 'input window, operand 2, single buffered']
    #allocation7 [shape = 'u8[131072]{0}', space=vmem, size = 0x20000, scoped, tag = 'input window, operand 3, single buffered']
    #allocation8 [shape = 's32[1]{0}', space=sflag, size = 0x4, scoped, tag = 'scoped memory for tabular_llama_forward.1']
    #allocation9 [shape = 'u8[32768]{0}', space=vmem, size = 0x8000, scoped, tag = 'input window, operand 4, single buffered']
    %10 = vsyncpa [#allocation3], 0
    %11 = vsyncpa [#allocation5], 0
    %12 = vsyncpa [#allocation8], 0
    // Predicated region
    $region2: #{tabular_llama_forward.1} parent=1 // pred_check
      _
    $region3: #{tabular_llama_forward.1} parent=1 // pred_check_branch
      %14 = sbr.rel (0) target = $region5
    $region4: #{tabular_llama_forward.1} parent=1 // pred_region
      %s16 = ssub.s32 128, 128
      %17 = vsyncadd [#allocation3], %s16
      %s19 = sshll.u32 [#allocation2], 4
      %s20 = int_to_ptr.vmem [resolvable:$true] %s19
      %22 = dma.hbm_to_vmem [thread:$0]  %s0, 128, %s20, [#allocation3]
    $region5: #{tabular_llama_forward.1} parent=1 // pred_fallthru
      _
    // Predicated region
    $region6: #{tabular_llama_forward.1} parent=1 // pred_check
      _
    $region7: #{tabular_llama_forward.1} parent=1 // pred_check_branch
      %24 = sbr.rel (0) target = $region9
    $region8: #{tabular_llama_forward.1} parent=1 // pred_region
      %s26 = ssub.s32 128, 128
      %27 = vsyncadd [#allocation5], %s26
      %s29 = sshll.u32 [#allocation4], 4
      %s30 = int_to_ptr.vmem [resolvable:$true] %s29
      %32 = dma.hbm_to_vmem [thread:$0]  %s1, 128, %s30, [#allocation5]
    $region9: #{tabular_llama_forward.1} parent=1 // pred_fallthru
      _
    // Predicated region
    $region10: #{tabular_llama_forward.1} parent=1 // pred_check
      _
    $region11: #{tabular_llama_forward.1} parent=1 // pred_check_branch
      %34 = sbr.rel (0) target = $region13
    $region12: #{tabular_llama_forward.1} parent=1 // pred_region
      %s36 = ssub.s32 3072, 3072
      %37 = vsyncadd [#allocation5], %s36
      %s38 = sshll.u32 [#allocation6], 4
      %s39 = int_to_ptr.vmem [resolvable:$true] %s38
      %44 = dma.hbm_to_vmem [thread:$0]  %s2, 3072, %s39, [#allocation5], 192, 192, 12
    $region13: #{tabular_llama_forward.1} parent=1 // pred_fallthru
      _
    // Predicated region
    $region14: #{tabular_llama_forward.1} parent=1 // pred_check
      _
    $region15: #{tabular_llama_forward.1} parent=1 // pred_check_branch
      %46 = sbr.rel (0) target = $region17
    $region16: #{tabular_llama_forward.1} parent=1 // pred_region
      %s48 = ssub.s32 4096, 4096
      %49 = vsyncadd [#allocation8], %s48
      %s50 = sshll.u32 [#allocation7], 4
      %s51 = int_to_ptr.vmem [resolvable:$true] %s50
      %56 = dma.hbm_to_vmem [thread:$0]  %s3, 4096, %s51, [#allocation8], 256, 256, 16
    $region17: #{tabular_llama_forward.1} parent=1 // pred_fallthru
      _
    // Predicated region
    $region18: #{tabular_llama_forward.1} parent=1 // pred_check
      _
    $region19: #{tabular_llama_forward.1} parent=1 // pred_check_branch
      %58 = sbr.rel (0) target = $region21
    $region20: #{tabular_llama_forward.1} parent=1 // pred_region
      %s60 = ssub.s32 1024, 1024
      %61 = vsyncadd [#allocation8], %s60
      %s62 = sshll.u32 [#allocation9], 4
      %s63 = int_to_ptr.vmem [resolvable:$true] %s62
      %68 = dma.hbm_to_vmem [thread:$0]  %s4, 1024, %s63, [#allocation8], 64, 64, 4
    $region21: #{tabular_llama_forward.1} parent=1 // pred_fallthru
      _
    // Predicated region
    $region22: #{tabular_llama_forward.1} parent=1 // pred_check
      _
    $region23: #{tabular_llama_forward.1} parent=1 // pred_check_branch
      %70 = sbr.rel (0) target = $region25
    $region24: #{tabular_llama_forward.1} parent=1 // pred_region
      %71 = dma.done [#allocation3], 128
    $region25: #{tabular_llama_forward.1} parent=1 // pred_fallthru
      _
    // Predicated region
    $region26: #{tabular_llama_forward.1} parent=1 // pred_check
      _
    $region27: #{tabular_llama_forward.1} parent=1 // pred_check_branch
      %73 = sbr.rel (0) target = $region29
    $region28: #{tabular_llama_forward.1} parent=1 // pred_region
      %74 = dma.done [#allocation5], 128
    $region29: #{tabular_llama_forward.1} parent=1 // pred_fallthru
      _
    // Predicated region
    $region30: #{tabular_llama_forward.1} parent=1 // pred_check
      _
    $region31: #{tabular_llama_forward.1} parent=1 // pred_check_branch
      %76 = sbr.rel (0) target = $region33
    $region32: #{tabular_llama_forward.1} parent=1 // pred_region
      %77 = dma.done [#allocation5], 3072
    $region33: #{tabular_llama_forward.1} parent=1 // pred_fallthru
      _
    // Predicated region
    $region34: #{tabular_llama_forward.1} parent=1 // pred_check
      _
    $region35: #{tabular_llama_forward.1} parent=1 // pred_check_branch
      %79 = sbr.rel (0) target = $region37
    $region36: #{tabular_llama_forward.1} parent=1 // pred_region
      %80 = dma.done [#allocation8], 4096
    $region37: #{tabular_llama_forward.1} parent=1 // pred_fallthru
      _
    // Predicated region
    $region38: #{tabular_llama_forward.1} parent=1 // pred_check
      _
    $region39: #{tabular_llama_forward.1} parent=1 // pred_check_branch
      %82 = sbr.rel (0) target = $region41
    $region40: #{tabular_llama_forward.1} parent=1 // pred_region
      %83 = dma.done [#allocation8], 1024
    $region41: #{tabular_llama_forward.1} parent=1 // pred_fallthru
      _
    %v85 = vld [vmem:[#allocation4] sm:$0xff]
    %v86 = vld [vmem:[#allocation2] sm:$0xff]
    %v87 = vpack.c.bf16 %v86, %v86
    %v88 = vld [vmem:[#allocation6] sm:$0xf]
    %v89 = vld [vmem:[#allocation6 + $0xc] sm:$0xf]
    %v90 = vlaneseq
    %v91 = vshrl.u32 %v90, 7
    %v92 = vsub.s32 0, %v91
    %v93 = vrot.slane %v85, %v92
    %v96 = vunpack.c.l.b16 %v88
    %v97 = vunpack.c.l.b16 %v89
    %v98 = vpack.c.b16 %v97, %v96
    %vm100 = vcmask 130048
    %v102 = vsel %vm100, %v87, 0
    %104 = vmatprep.subr.bf16.mxu0 0
    %105 = vmatpush1.bf16.msra.mxu0 %v98
    %106 = vmatprep.subr.bf16.mxu0 0
    %107 = vmatpush1.bf16.msra.mxu0 0
    %108 = vmatprep.subr.bf16.mxu0 0
    %109 = vmatpush1.bf16.msra.mxu0 0
    %110 = vmatprep.subr.bf16.mxu0 0
    %111 = vmatpush1.bf16.msra.mxu0 0
    %112 = vmatprep.subr.bf16.mxu0 0
    %113 = vmatpush1.bf16.msra.mxu0 0
    %114 = vmatprep.subr.bf16.mxu0 0
    %115 = vmatpush1.bf16.msra.mxu0 0
    %116 = vmatprep.subr.bf16.mxu0 0
    %117 = vmatpush1.bf16.msra.mxu0 0
    %118 = vmatprep.subr.bf16.mxu0 0
    %119 = vmatpush1.bf16.msra.mxu0 0
    %120 = vmatprep.subr.bf16.mxu0 0
    %121 = vmatpush1.bf16.msra.mxu0 0
    %122 = vmatprep.subr.bf16.mxu0 0
    %123 = vmatpush1.bf16.msra.mxu0 0
    %124 = vmatprep.subr.bf16.mxu0 0
    %125 = vmatpush1.bf16.msra.mxu0 0
    %126 = vmatprep.subr.bf16.mxu0 0
    %127 = vmatpush1.bf16.msra.mxu0 0
    %128 = vmatprep.subr.bf16.mxu0 0
    %129 = vmatpush1.bf16.msra.mxu0 0
    %130 = vmatprep.subr.bf16.mxu0 0
    %131 = vmatpush1.bf16.msra.mxu0 0
    %132 = vmatprep.subr.bf16.mxu0 0
    %133 = vmatpush1.bf16.msra.mxu0 0
    %134 = vmatprep.subr.bf16.mxu0 0
    %135 = vmatpush1.bf16.msra.mxu0 0
    %136 = vmatprep.mubr.bf16.mxu0 0
    %137 = vmatmul.mubr.bf16.gmra.mrb[0].mxu0 %v102
    %v138 = vpop.f32.mrb[0].mxu0
    %v139 = vadd.f32 %v93, %v138
    %v140 = vpop.f32.mrb[0].mxu0
    %v141 = vpop.f32.mrb[0].mxu0
    %v142 = vpop.f32.mrb[0].mxu0
    %143 = vdwg.mxu0
    %v144 = vmax.f32 %v139, 0.0
    %v145 = vpack.c.bf16 %v144, %v144
    %v146 = vld [vmem:[#allocation6 + $0x4] sm:$0xff]
    %v147 = vld [vmem:[#allocation6 + $0x10] sm:$0xff]
    %v148 = vld [vmem:[#allocation6 + $0x1c] sm:$0xff]
    %v149 = vld [vmem:[#allocation6 + $0x28] sm:$0xff]
    %v150 = vld [vmem:[#allocation6 + $0x34] sm:$0xff]
    %v151 = vld [vmem:[#allocation6 + $0x40] sm:$0xff]
    %v152 = vld [vmem:[#allocation6 + $0x4c] sm:$0xff]
    %v153 = vld [vmem:[#allocation6 + $0x58] sm:$0xff]
    %v154 = vld [vmem:[#allocation6 + $0x64] sm:$0xff]
    %v155 = vld [vmem:[#allocation6 + $0x70] sm:$0xff]
    %v156 = vld [vmem:[#allocation6 + $0x7c] sm:$0xff]
    %v157 = vld [vmem:[#allocation6 + $0x88] sm:$0xff]
    %v158 = vld [vmem:[#allocation6 + $0x94] sm:$0xff]
    %v159 = vld [vmem:[#allocation6 + $0xa0] sm:$0xff]
    %v160 = vld [vmem:[#allocation6 + $0xac] sm:$0xff]
    %v161 = vld [vmem:[#allocation6 + $0xb8] sm:$0xff]
    %v178 = vunpack.c.l.b16 %v146
    %v179 = vunpack.c.h.b16 %v146
    %v180 = vunpack.c.l.b16 %v147
    %v181 = vunpack.c.h.b16 %v147
    %v182 = vunpack.c.l.b16 %v148
    %v183 = vunpack.c.h.b16 %v148
    %v184 = vunpack.c.l.b16 %v149
    %v185 = vunpack.c.h.b16 %v149
    %v186 = vunpack.c.l.b16 %v150
    %v187 = vunpack.c.h.b16 %v150
    %v188 = vunpack.c.l.b16 %v151
    %v189 = vunpack.c.h.b16 %v151
    %v190 = vunpack.c.l.b16 %v152
    %v191 = vunpack.c.h.b16 %v152
    %v192 = vunpack.c.l.b16 %v153
    %v193 = vunpack.c.h.b16 %v153
    %v194 = vunpack.c.l.b16 %v154
    %v195 = vunpack.c.h.b16 %v154
    %v196 = vunpack.c.l.b16 %v155
    %v197 = vunpack.c.h.b16 %v155
    %v198 = vunpack.c.l.b16 %v156
    %v199 = vunpack.c.h.b16 %v156
    %v200 = vunpack.c.l.b16 %v157
    %v201 = vunpack.c.h.b16 %v157
    %v202 = vunpack.c.l.b16 %v158
    %v203 = vunpack.c.h.b16 %v158
    %v204 = vunpack.c.l.b16 %v159
    %v205 = vunpack.c.h.b16 %v159
    %v206 = vunpack.c.l.b16 %v160
    %v207 = vunpack.c.h.b16 %v160
    %v208 = vunpack.c.l.b16 %v161
    %v209 = vunpack.c.h.b16 %v161
    %v210 = vpack.c.b16 %v180, %v178
    %v211 = vpack.c.b16 %v181, %v179
    %v212 = vpack.c.b16 %v184, %v182
    %v213 = vpack.c.b16 %v185, %v183
    %v214 = vpack.c.b16 %v188, %v186
    %v215 = vpack.c.b16 %v189, %v187
    %v216 = vpack.c.b16 %v192, %v190
    %v217 = vpack.c.b16 %v193, %v191
    %v218 = vpack.c.b16 %v196, %v194
    %v219 = vpack.c.b16 %v197, %v195
    %v220 = vpack.c.b16 %v200, %v198
    %v221 = vpack.c.b16 %v201, %v199
    %v222 = vpack.c.b16 %v204, %v202
    %v223 = vpack.c.b16 %v205, %v203
    %v224 = vpack.c.b16 %v208, %v206
    %v225 = vpack.c.b16 %v209, %v207
    %242 = vmatprep.subr.bf16.mxu0 %v211
    %243 = vmatpush1.bf16.msra.mxu0 %v210
    %244 = vmatprep.subr.bf16.mxu0 %v213
    %245 = vmatpush1.bf16.msra.mxu0 %v212
    %246 = vmatprep.subr.bf16.mxu0 %v215
    %247 = vmatpush1.bf16.msra.mxu0 %v214
    %248 = vmatprep.subr.bf16.mxu0 %v217
    %249 = vmatpush1.bf16.msra.mxu0 %v216
    %250 = vmatprep.subr.bf16.mxu0 %v219
    %251 = vmatpush1.bf16.msra.mxu0 %v218
    %252 = vmatprep.subr.bf16.mxu0 %v221
    %253 = vmatpush1.bf16.msra.mxu0 %v220
    %254 = vmatprep.subr.bf16.mxu0 %v223
    %255 = vmatpush1.bf16.msra.mxu0 %v222
    %256 = vmatprep.subr.bf16.mxu0 %v225
    %257 = vmatpush1.bf16.msra.mxu0 %v224
    %258 = vmatprep.subr.bf16.mxu0 0
    %259 = vmatpush1.bf16.msra.mxu0 0
    %260 = vmatprep.subr.bf16.mxu0 0
    %261 = vmatpush1.bf16.msra.mxu0 0
    %262 = vmatprep.subr.bf16.mxu0 0
    %263 = vmatpush1.bf16.msra.mxu0 0
    %264 = vmatprep.subr.bf16.mxu0 0
    %265 = vmatpush1.bf16.msra.mxu0 0
    %266 = vmatprep.subr.bf16.mxu0 0
    %267 = vmatpush1.bf16.msra.mxu0 0
    %268 = vmatprep.subr.bf16.mxu0 0
    %269 = vmatpush1.bf16.msra.mxu0 0
    %270 = vmatprep.subr.bf16.mxu0 0
    %271 = vmatpush1.bf16.msra.mxu0 0
    %272 = vmatprep.subr.bf16.mxu0 0
    %273 = vmatpush1.bf16.msra.mxu0 0
    %274 = vmatprep.mubr.bf16.mxu0 0
    %275 = vmatmul.mubr.bf16.gmra.mrb[0].mxu0 %v145
    %v276 = vpop.f32.mrb[0].mxu0
    %v277 = vadd.f32 0.0, %v276
    %v278 = vpop.f32.mrb[0].mxu0
    %v279 = vadd.f32 0.0, %v278
    %v280 = vpop.f32.mrb[0].mxu0
    %v281 = vpop.f32.mrb[0].mxu0
    %282 = vdwg.mxu0
    %v283 = vlaneseq
    %v284 = vshrl.u32 %v283, 7
    %v285 = vsub.s32 1, %v284
    %v286 = vrot.slane %v85, %v285
    %v287 = vadd.f32 %v279, %v286
    %v288 = vpack.c.bf16 %v287, %v287
    %v289 = vunpack.c.l.bf16 %v288
    %v290 = vmul.f32 %v289, %v289
    %291 = vadd.xlane.f32.xlu0 %v290
    %v292 = vpop.xlane.xlu0 %291
    %v293 = vrcp.pop 64.0
    %v294 = vmul.f32 %v292, %v293
    %v295 = vadd.f32 %v294, 1e-06
    %v296 = vrsqrt.pop %v295
    %v297 = vmul.f32 %v289, %v296
    %v298 = vpack.c.bf16 %v297, %v297
    %v299 = vld [vmem:[#allocation7 + $0x8] sm:$0xf]
    %v300 = vld [vmem:[#allocation7 + $0x18] sm:$0xf]
    %v301 = vld [vmem:[#allocation7 + $0x28] sm:$0xf]
    %v302 = vld [vmem:[#allocation7 + $0x38] sm:$0xf]
    %v303 = vld [vmem:[#allocation7 + $0x48] sm:$0xf]
    %v304 = vld [vmem:[#allocation7 + $0x58] sm:$0xf]
    %v305 = vld [vmem:[#allocation7 + $0x68] sm:$0xf]
    %v306 = vld [vmem:[#allocation7 + $0x78] sm:$0xf]
    %v307 = vld [vmem:[#allocation7 + $0x88] sm:$0xf]
    %v308 = vld [vmem:[#allocation7 + $0x98] sm:$0xf]
    %v309 = vld [vmem:[#allocation7 + $0xa8] sm:$0xf]
    %v310 = vld [vmem:[#allocation7 + $0xb8] sm:$0xf]
    %v311 = vld [vmem:[#allocation7 + $0xc8] sm:$0xf]
    %v312 = vld [vmem:[#allocation7 + $0xd8] sm:$0xf]
    %v313 = vld [vmem:[#allocation7 + $0xe8] sm:$0xf]
    %v314 = vld [vmem:[#allocation7 + $0xf8] sm:$0xf]
    %v331 = vunpack.c.l.b16 %v299
    %v332 = vunpack.c.l.b16 %v300
    %v333 = vunpack.c.l.b16 %v301
    %v334 = vunpack.c.l.b16 %v302
    %v335 = vunpack.c.l.b16 %v303
    %v336 = vunpack.c.l.b16 %v304
    %v337 = vunpack.c.l.b16 %v305
    %v338 = vunpack.c.l.b16 %v306
    %v339 = vunpack.c.l.b16 %v307
    %v340 = vunpack.c.l.b16 %v308
    %v341 = vunpack.c.l.b16 %v309
    %v342 = vunpack.c.l.b16 %v310
    %v343 = vunpack.c.l.b16 %v311
    %v344 = vunpack.c.l.b16 %v312
    %v345 = vunpack.c.l.b16 %v313
    %v346 = vunpack.c.l.b16 %v314
    %v347 = vpack.c.b16 %v332, %v331
    %v348 = vpack.c.b16 %v334, %v333
    %v349 = vpack.c.b16 %v336, %v335
    %v350 = vpack.c.b16 %v338, %v337
    %v351 = vpack.c.b16 %v340, %v339
    %v352 = vpack.c.b16 %v342, %v341
    %v353 = vpack.c.b16 %v344, %v343
    %v354 = vpack.c.b16 %v346, %v345
    %363 = vmatprep.subr.bf16.mxu0 0
    %364 = vmatpush1.bf16.msra.mxu0 %v347
    %365 = vmatprep.subr.bf16.mxu0 0
    %366 = vmatpush1.bf16.msra.mxu0 %v348
    %367 = vmatprep.subr.bf16.mxu0 0
    %368 = vmatpush1.bf16.msra.mxu0 %v349
    %369 = vmatprep.subr.bf16.mxu0 0
    %370 = vmatpush1.bf16.msra.mxu0 %v350
    %371 = vmatprep.subr.bf16.mxu0 0
    %372 = vmatpush1.bf16.msra.mxu0 %v351
    %373 = vmatprep.subr.bf16.mxu0 0
    %374 = vmatpush1.bf16.msra.mxu0 %v352
    %375 = vmatprep.subr.bf16.mxu0 0
    %376 = vmatpush1.bf16.msra.mxu0 %v353
    %377 = vmatprep.subr.bf16.mxu0 0
    %378 = vmatpush1.bf16.msra.mxu0 %v354
    %379 = vmatprep.subr.bf16.mxu0 0
    %380 = vmatpush1.bf16.msra.mxu0 0
    %381 = vmatprep.subr.bf16.mxu0 0
    %382 = vmatpush1.bf16.msra.mxu0 0
    %383 = vmatprep.subr.bf16.mxu0 0
    %384 = vmatpush1.bf16.msra.mxu0 0
    %385 = vmatprep.subr.bf16.mxu0 0
    %386 = vmatpush1.bf16.msra.mxu0 0
    %387 = vmatprep.subr.bf16.mxu0 0
    %388 = vmatpush1.bf16.msra.mxu0 0
    %389 = vmatprep.subr.bf16.mxu0 0
    %390 = vmatpush1.bf16.msra.mxu0 0
    %391 = vmatprep.subr.bf16.mxu0 0
    %392 = vmatpush1.bf16.msra.mxu0 0
    %393 = vmatprep.subr.bf16.mxu0 0
    %394 = vmatpush1.bf16.msra.mxu0 0
    %395 = vmatprep.mubr.bf16.mxu0 0
    %396 = vmatmul.mubr.bf16.gmra.mrb[0].mxu0 %v298
    %v397 = vpop.f32.mrb[0].mxu0
    %v398 = vadd.f32 0.0, %v397
    %v399 = vpop.f32.mrb[0].mxu0
    %v400 = vpop.f32.mrb[0].mxu0
    %v401 = vpop.f32.mrb[0].mxu0
    %402 = vdwg.mxu0
    %v403 = vadd.f32 %v289, %v398
    %v404 = vmul.f32 %v403, %v403
    %405 = vadd.xlane.f32.xlu0 %v404
    %v406 = vpop.xlane.xlu0 %405
    %v407 = vmul.f32 %v406, %v293
    %v408 = vadd.f32 %v407, 1e-06
    %v409 = vrsqrt.pop %v408
    %v410 = vmul.f32 %v403, %v409
    %v411 = vpack.c.bf16 %v410, %v410
    %v412 = vld [vmem:[#allocation7] sm:$0xff]
    %v413 = vld [vmem:[#allocation7 + $0x10] sm:$0xff]
    %v414 = vld [vmem:[#allocation7 + $0x20] sm:$0xff]
    %v415 = vld [vmem:[#allocation7 + $0x30] sm:$0xff]
    %v416 = vld [vmem:[#allocation7 + $0x40] sm:$0xff]
    %v417 = vld [vmem:[#allocation7 + $0x50] sm:$0xff]
    %v418 = vld [vmem:[#allocation7 + $0x60] sm:$0xff]
    %v419 = vld [vmem:[#allocation7 + $0x70] sm:$0xff]
    %v420 = vld [vmem:[#allocation7 + $0x80] sm:$0xff]
    %v421 = vld [vmem:[#allocation7 + $0x90] sm:$0xff]
    %v422 = vld [vmem:[#allocation7 + $0xa0] sm:$0xff]
    %v423 = vld [vmem:[#allocation7 + $0xb0] sm:$0xff]
    %v424 = vld [vmem:[#allocation7 + $0xc0] sm:$0xff]
    %v425 = vld [vmem:[#allocation7 + $0xd0] sm:$0xff]
    %v426 = vld [vmem:[#allocation7 + $0xe0] sm:$0xff]
    %v427 = vld [vmem:[#allocation7 + $0xf0] sm:$0xff]
    %v444 = vunpack.c.l.b16 %v412
    %v445 = vunpack.c.h.b16 %v412
    %v446 = vunpack.c.l.b16 %v413
    %v447 = vunpack.c.h.b16 %v413
    %v448 = vunpack.c.l.b16 %v414
    %v449 = vunpack.c.h.b16 %v414
    %v450 = vunpack.c.l.b16 %v415
    %v451 = vunpack.c.h.b16 %v415
    %v452 = vunpack.c.l.b16 %v416
    %v453 = vunpack.c.h.b16 %v416
    %v454 = vunpack.c.l.b16 %v417
    %v455 = vunpack.c.h.b16 %v417
    %v456 = vunpack.c.l.b16 %v418
    %v457 = vunpack.c.h.b16 %v418
    %v458 = vunpack.c.l.b16 %v419
    %v459 = vunpack.c.h.b16 %v419
    %v460 = vunpack.c.l.b16 %v420
    %v461 = vunpack.c.h.b16 %v420
    %v462 = vunpack.c.l.b16 %v421
    %v463 = vunpack.c.h.b16 %v421
    %v464 = vunpack.c.l.b16 %v422
    %v465 = vunpack.c.h.b16 %v422
    %v466 = vunpack.c.l.b16 %v423
    %v467 = vunpack.c.h.b16 %v423
    %v468 = vunpack.c.l.b16 %v424
    %v469 = vunpack.c.h.b16 %v424
    %v470 = vunpack.c.l.b16 %v425
    %v471 = vunpack.c.h.b16 %v425
    %v472 = vunpack.c.l.b16 %v426
    %v473 = vunpack.c.h.b16 %v426
    %v474 = vunpack.c.l.b16 %v427
    %v475 = vunpack.c.h.b16 %v427
    %v476 = vpack.c.b16 %v446, %v444
    %v477 = vpack.c.b16 %v447, %v445
    %v478 = vpack.c.b16 %v450, %v448
    %v479 = vpack.c.b16 %v451, %v449
    %v480 = vpack.c.b16 %v454, %v452
    %v481 = vpack.c.b16 %v455, %v453
    %v482 = vpack.c.b16 %v458, %v456
    %v483 = vpack.c.b16 %v459, %v457
    %v484 = vpack.c.b16 %v462, %v460
    %v485 = vpack.c.b16 %v463, %v461
    %v486 = vpack.c.b16 %v466, %v464
    %v487 = vpack.c.b16 %v467, %v465
    %v488 = vpack.c.b16 %v470, %v468
    %v489 = vpack.c.b16 %v471, %v469
    %v490 = vpack.c.b16 %v474, %v472
    %v491 = vpack.c.b16 %v475, %v473
    %508 = vmatprep.subr.bf16.mxu0 %v477
    %509 = vmatpush1.bf16.msra.mxu0 %v476
    %510 = vmatprep.subr.bf16.mxu0 %v479
    %511 = vmatpush1.bf16.msra.mxu0 %v478
    %512 = vmatprep.subr.bf16.mxu0 %v481
    %513 = vmatpush1.bf16.msra.mxu0 %v480
    %514 = vmatprep.subr.bf16.mxu0 %v483
    %515 = vmatpush1.bf16.msra.mxu0 %v482
    %516 = vmatprep.subr.bf16.mxu0 %v485
    %517 = vmatpush1.bf16.msra.mxu0 %v484
    %518 = vmatprep.subr.bf16.mxu0 %v487
    %519 = vmatpush1.bf16.msra.mxu0 %v486
    %520 = vmatprep.subr.bf16.mxu0 %v489
    %521 = vmatpush1.bf16.msra.mxu0 %v488
    %522 = vmatprep.subr.bf16.mxu0 %v491
    %523 = vmatpush1.bf16.msra.mxu0 %v490
    %524 = vmatprep.subr.bf16.mxu0 0
    %525 = vmatpush1.bf16.msra.mxu0 0
    %526 = vmatprep.subr.bf16.mxu0 0
    %527 = vmatpush1.bf16.msra.mxu0 0
    %528 = vmatprep.subr.bf16.mxu0 0
    %529 = vmatpush1.bf16.msra.mxu0 0
    %530 = vmatprep.subr.bf16.mxu0 0
    %531 = vmatpush1.bf16.msra.mxu0 0
    %532 = vmatprep.subr.bf16.mxu0 0
    %533 = vmatpush1.bf16.msra.mxu0 0
    %534 = vmatprep.subr.bf16.mxu0 0
    %535 = vmatpush1.bf16.msra.mxu0 0
    %536 = vmatprep.subr.bf16.mxu0 0
    %537 = vmatpush1.bf16.msra.mxu0 0
    %538 = vmatprep.subr.bf16.mxu0 0
    %539 = vmatpush1.bf16.msra.mxu0 0
    %540 = vmatprep.mubr.bf16.mxu0 0
    %541 = vmatmul.mubr.bf16.gmra.mrb[0].mxu0 %v411
    %v542 = vpop.f32.mrb[0].mxu0
    %v543 = vadd.f32 0.0, %v542
    %v544 = vpop.f32.mrb[0].mxu0
    %v545 = vadd.f32 0.0, %v544
    %v546 = vpop.f32.mrb[0].mxu0
    %v547 = vpop.f32.mrb[0].mxu0
    %548 = vdwg.mxu0
    %v549 = vsub.f32 0.0, %v543
    %v550 = vmul.f32 %v549, 1.442695
    %v551 = vpow.pop %v550
    %v552 = vadd.f32 %v551, 1.0
    %v553 = vrcp.pop %v552
    %v554 = vmul.f32 %v543, %v553
    %v555 = vmul.f32 %v554, %v545
    %v556 = vpack.c.bf16 %v555, %v555
    %v557 = vld [vmem:[#allocation9] sm:$0xf]
    %v558 = vld [vmem:[#allocation9 + $0x4] sm:$0xf]
    %v559 = vld [vmem:[#allocation9 + $0x8] sm:$0xf]
    %v560 = vld [vmem:[#allocation9 + $0xc] sm:$0xf]
    %v561 = vld [vmem:[#allocation9 + $0x10] sm:$0xf]
    %v562 = vld [vmem:[#allocation9 + $0x14] sm:$0xf]
    %v563 = vld [vmem:[#allocation9 + $0x18] sm:$0xf]
    %v564 = vld [vmem:[#allocation9 + $0x1c] sm:$0xf]
    %v565 = vld [vmem:[#allocation9 + $0x20] sm:$0xf]
    %v566 = vld [vmem:[#allocation9 + $0x24] sm:$0xf]
    %v567 = vld [vmem:[#allocation9 + $0x28] sm:$0xf]
    %v568 = vld [vmem:[#allocation9 + $0x2c] sm:$0xf]
    %v569 = vld [vmem:[#allocation9 + $0x30] sm:$0xf]
    %v570 = vld [vmem:[#allocation9 + $0x34] sm:$0xf]
    %v571 = vld [vmem:[#allocation9 + $0x38] sm:$0xf]
    %v572 = vld [vmem:[#allocation9 + $0x3c] sm:$0xf]
    %v589 = vunpack.c.l.b16 %v557
    %v590 = vunpack.c.l.b16 %v558
    %v591 = vunpack.c.l.b16 %v559
    %v592 = vunpack.c.l.b16 %v560
    %v593 = vunpack.c.l.b16 %v561
    %v594 = vunpack.c.l.b16 %v562
    %v595 = vunpack.c.l.b16 %v563
    %v596 = vunpack.c.l.b16 %v564
    %v597 = vunpack.c.l.b16 %v565
    %v598 = vunpack.c.l.b16 %v566
    %v599 = vunpack.c.l.b16 %v567
    %v600 = vunpack.c.l.b16 %v568
    %v601 = vunpack.c.l.b16 %v569
    %v602 = vunpack.c.l.b16 %v570
    %v603 = vunpack.c.l.b16 %v571
    %v604 = vunpack.c.l.b16 %v572
    %v605 = vpack.c.b16 %v590, %v589
    %v606 = vpack.c.b16 %v592, %v591
    %v607 = vpack.c.b16 %v594, %v593
    %v608 = vpack.c.b16 %v596, %v595
    %v609 = vpack.c.b16 %v598, %v597
    %v610 = vpack.c.b16 %v600, %v599
    %v611 = vpack.c.b16 %v602, %v601
    %v612 = vpack.c.b16 %v604, %v603
    %621 = vmatprep.subr.bf16.mxu0 0
    %622 = vmatpush1.bf16.msra.mxu0 %v605
    %623 = vmatprep.subr.bf16.mxu0 0
    %624 = vmatpush1.bf16.msra.mxu0 %v606
    %625 = vmatprep.subr.bf16.mxu0 0
    %626 = vmatpush1.bf16.msra.mxu0 %v607
    %627 = vmatprep.subr.bf16.mxu0 0
    %628 = vmatpush1.bf16.msra.mxu0 %v608
    %629 = vmatprep.subr.bf16.mxu0 0
    %630 = vmatpush1.bf16.msra.mxu0 %v609
    %631 = vmatprep.subr.bf16.mxu0 0
    %632 = vmatpush1.bf16.msra.mxu0 %v610
    %633 = vmatprep.subr.bf16.mxu0 0
    %634 = vmatpush1.bf16.msra.mxu0 %v611
    %635 = vmatprep.subr.bf16.mxu0 0
    %636 = vmatpush1.bf16.msra.mxu0 %v612
    %637 = vmatprep.subr.bf16.mxu0 0
    %638 = vmatpush1.bf16.msra.mxu0 0
    %639 = vmatprep.subr.bf16.mxu0 0
    %640 = vmatpush1.bf16.msra.mxu0 0
    %641 = vmatprep.subr.bf16.mxu0 0
    %642 = vmatpush1.bf16.msra.mxu0 0
    %643 = vmatprep.subr.bf16.mxu0 0
    %644 = vmatpush1.bf16.msra.mxu0 0
    %645 = vmatprep.subr.bf16.mxu0 0
    %646 = vmatpush1.bf16.msra.mxu0 0
    %647 = vmatprep.subr.bf16.mxu0 0
    %648 = vmatpush1.bf16.msra.mxu0 0
    %649 = vmatprep.subr.bf16.mxu0 0
    %650 = vmatpush1.bf16.msra.mxu0 0
    %651 = vmatprep.subr.bf16.mxu0 0
    %652 = vmatpush1.bf16.msra.mxu0 0
    %653 = vmatprep.mubr.bf16.mxu0 0
    %654 = vmatmul.mubr.bf16.gmra.mrb[0].mxu0 %v556
    %v655 = vpop.f32.mrb[0].mxu0
    %v656 = vadd.f32 0.0, %v655
    %v657 = vpop.f32.mrb[0].mxu0
    %v658 = vpop.f32.mrb[0].mxu0
    %v659 = vpop.f32.mrb[0].mxu0
    %660 = vdwg.mxu0
    %v661 = vadd.f32 %v403, %v656
    %v662 = vmul.f32 %v661, %v661
    %663 = vadd.xlane.f32.xlu0 %v662
    %v664 = vpop.xlane.xlu0 %663
    %v665 = vmul.f32 %v664, %v293
    %v666 = vadd.f32 %v665, 1e-06
    %v667 = vrsqrt.pop %v666
    %v668 = vmul.f32 %v661, %v667
    %v669 = vpack.c.bf16 %v668, %v668
    %v670 = vld [vmem:[#allocation7 + $0xc] sm:$0xf]
    %v671 = vld [vmem:[#allocation7 + $0x1c] sm:$0xf]
    %v672 = vld [vmem:[#allocation7 + $0x2c] sm:$0xf]
    %v673 = vld [vmem:[#allocation7 + $0x3c] sm:$0xf]
    %v674 = vld [vmem:[#allocation7 + $0x4c] sm:$0xf]
    %v675 = vld [vmem:[#allocation7 + $0x5c] sm:$0xf]
    %v676 = vld [vmem:[#allocation7 + $0x6c] sm:$0xf]
    %v677 = vld [vmem:[#allocation7 + $0x7c] sm:$0xf]
    %v678 = vld [vmem:[#allocation7 + $0x8c] sm:$0xf]
    %v679 = vld [vmem:[#allocation7 + $0x9c] sm:$0xf]
    %v680 = vld [vmem:[#allocation7 + $0xac] sm:$0xf]
    %v681 = vld [vmem:[#allocation7 + $0xbc] sm:$0xf]
    %v682 = vld [vmem:[#allocation7 + $0xcc] sm:$0xf]
    %v683 = vld [vmem:[#allocation7 + $0xdc] sm:$0xf]
    %v684 = vld [vmem:[#allocation7 + $0xec] sm:$0xf]
    %v685 = vld [vmem:[#allocation7 + $0xfc] sm:$0xf]
    %v702 = vunpack.c.l.b16 %v670
    %v703 = vunpack.c.l.b16 %v671
    %v704 = vunpack.c.l.b16 %v672
    %v705 = vunpack.c.l.b16 %v673
    %v706 = vunpack.c.l.b16 %v674
    %v707 = vunpack.c.l.b16 %v675
    %v708 = vunpack.c.l.b16 %v676
    %v709 = vunpack.c.l.b16 %v677
    %v710 = vunpack.c.l.b16 %v678
    %v711 = vunpack.c.l.b16 %v679
    %v712 = vunpack.c.l.b16 %v680
    %v713 = vunpack.c.l.b16 %v681
    %v714 = vunpack.c.l.b16 %v682
    %v715 = vunpack.c.l.b16 %v683
    %v716 = vunpack.c.l.b16 %v684
    %v717 = vunpack.c.l.b16 %v685
    %v718 = vpack.c.b16 %v703, %v702
    %v719 = vpack.c.b16 %v705, %v704
    %v720 = vpack.c.b16 %v707, %v706
    %v721 = vpack.c.b16 %v709, %v708
    %v722 = vpack.c.b16 %v711, %v710
    %v723 = vpack.c.b16 %v713, %v712
    %v724 = vpack.c.b16 %v715, %v714
    %v725 = vpack.c.b16 %v717, %v716
    %734 = vmatprep.subr.bf16.mxu0 0
    %735 = vmatpush1.bf16.msra.mxu0 %v718
    %736 = vmatprep.subr.bf16.mxu0 0
    %737 = vmatpush1.bf16.msra.mxu0 %v719
    %738 = vmatprep.subr.bf16.mxu0 0
    %739 = vmatpush1.bf16.msra.mxu0 %v720
    %740 = vmatprep.subr.bf16.mxu0 0
    %741 = vmatpush1.bf16.msra.mxu0 %v721
    %742 = vmatprep.subr.bf16.mxu0 0
    %743 = vmatpush1.bf16.msra.mxu0 %v722
    %744 = vmatprep.subr.bf16.mxu0 0
    %745 = vmatpush1.bf16.msra.mxu0 %v723
    %746 = vmatprep.subr.bf16.mxu0 0
    %747 = vmatpush1.bf16.msra.mxu0 %v724
    %748 = vmatprep.subr.bf16.mxu0 0
    %749 = vmatpush1.bf16.msra.mxu0 %v725
    %750 = vmatprep.subr.bf16.mxu0 0
    %751 = vmatpush1.bf16.msra.mxu0 0
    %752 = vmatprep.subr.bf16.mxu0 0
    %753 = vmatpush1.bf16.msra.mxu0 0
    %754 = vmatprep.subr.bf16.mxu0 0
    %755 = vmatpush1.bf16.msra.mxu0 0
    %756 = vmatprep.subr.bf16.mxu0 0
    %757 = vmatpush1.bf16.msra.mxu0 0
    %758 = vmatprep.subr.bf16.mxu0 0
    %759 = vmatpush1.bf16.msra.mxu0 0
    %760 = vmatprep.subr.bf16.mxu0 0
    %761 = vmatpush1.bf16.msra.mxu0 0
    %762 = vmatprep.subr.bf16.mxu0 0
    %763 = vmatpush1.bf16.msra.mxu0 0
    %764 = vmatprep.subr.bf16.mxu0 0
    %765 = vmatpush1.bf16.msra.mxu0 0
    %766 = vmatprep.mubr.bf16.mxu0 0
    %767 = vmatmul.mubr.bf16.gmra.mrb[0].mxu0 %v669
    %v768 = vpop.f32.mrb[0].mxu0
    %v769 = vadd.f32 0.0, %v768
    %v770 = vpop.f32.mrb[0].mxu0
    %v771 = vpop.f32.mrb[0].mxu0
    %v772 = vpop.f32.mrb[0].mxu0
    %773 = vdwg.mxu0
    %v774 = vadd.f32 %v277, %v769
    %v775 = vlaneseq
    %v776 = vshrl.u32 %v775, 7
    %v777 = vsub.s32 2, %v776
    %v778 = vrot.slane %v85, %v777
    %v779 = vadd.f32 %v774, %v778
    %780 = vst [vmem:[%s5] sm:$0xff] %v779
    // Predicated region
    $region42: #{tabular_llama_forward.1} parent=1 // pred_check
      _
    $region43: #{tabular_llama_forward.1} parent=1 // pred_check_branch
      %782 = sbr.rel (0) target = $region45
    $region44: #{tabular_llama_forward.1} parent=1 // pred_region
      _
    $region45: #{tabular_llama_forward.1} parent=1 // pred_fallthru
      _
    // Predicated region
    $region46: #{tabular_llama_forward.1} parent=1 // pred_check
      _
    $region47: #{tabular_llama_forward.1} parent=1 // pred_check_branch
      %784 = sbr.rel (0) target = $region49
    $region48: #{tabular_llama_forward.1} parent=1 // pred_region
      _
    $region49: #{tabular_llama_forward.1} parent=1 // pred_fallthru
      _
    %785 = vsyncpa [#allocation3], 1
    %786 = vsyncpa [#allocation5], 1
    %787 = vsyncpa [#allocation8], 1

</llo_original>
